<compile_context>
chip_gen: v5e
topology: v5e:2x2
jax: 0.10.0
libtpu: 0.0.40
codegen_flags: <defaults>
</compile_context>

<pallas_src>
import jax
import jax.numpy as jnp
import numpy as np
from jax.experimental import pallas as pl
from jax.experimental.pallas import tpu as pltpu

# ----------------------------------------------------------------------------
# Tag vocabularies (deterministic, in-script; stand-in for the spaCy tag lists)
# ----------------------------------------------------------------------------
SPACY_POS_TAGS = [
    "ADJ", "ADP", "ADV", "AUX", "CONJ", "CCONJ", "DET", "INTJ", "NOUN", "NUM",
    "PART", "PRON", "PROPN", "PUNCT", "SCONJ", "SYM", "VERB", "X", "SPACE", "EOL",
]
TAG_VOCABS = {"pos": SPACY_POS_TAGS}
# TODO(synk): fine-POS / dep vocabularies have > 32 classes; they would need a
# multi-word bitmask (or the per-class compare path) instead of a single int32 mask.

LANE = 128      # lane width
SUBLANE = 8     # sublane width


def _round_up(x: int, m: int) -> int:
    return ((x + m - 1) // m) * m


def _next_pow2(x: int) -> int:
    return 1 << (max(1, x) - 1).bit_length()


# ----------------------------------------------------------------------------
# Pallas kernel: fused multi-hot presence + append-to-features (bitmask reduce)
# ----------------------------------------------------------------------------
def _make_fused_kernel(feat_in_tile: int, num_classes: int):
    def kernel(feat_ref, tags_ref, out_ref):
        # feat_ref: (B_TILE, W)       f32  -- windowed view of the feature buffer
        # tags_ref: (B_TILE, SEQ_PAD) i8   -- tag ids per token, -1 = pad / unknown
        # out_ref:  (B_TILE, W)       f32  -- features (lanes < feat_in_tile) followed
        #                                     by the multi-hot at lane feat_in_tile + c
        b_tile, w = out_ref.shape
        seq_pad = tags_ref.shape[1]          # power of two (bucketed on host)

        one = jnp.int32(1)
        tags = tags_ref[...].astype(jnp.int32)                       # (B, S)
        # One set bit per present class; pad / unknown (-1) contributes no bits.
        bits = jnp.where(tags >= 0,
                         jnp.left_shift(one, jnp.maximum(tags, 0)),
                         jnp.int32(0))                               # (B, S)

        # OR-reduce over the token axis: log2(seq_pad) fold-in-half steps.
        width = seq_pad
        while width > 1:
            half = width // 2
            bits = jnp.bitwise_or(bits[:, :half], bits[:, half:width])
            width = half
        mask = bits                                                  # (B, 1)

        # Expand the per-row class bitmask to the output lanes (single pass).
        lane = jax.lax.broadcasted_iota(jnp.int32, (b_tile, w), 1)   # (B, W)
        class_ids = lane - feat_in_tile                              # class c at lane feat_in_tile + c
        shift = jnp.clip(class_ids, 0, 31)
        hot_bit = jnp.bitwise_and(jnp.right_shift(mask, shift), one)  # (B,1) >> (B,W) -> (B,W)
        in_range = jnp.logical_and(class_ids >= 0, class_ids < num_classes)
        hot = jnp.where(in_range, hot_bit, 0).astype(out_ref.dtype)

        out_ref[...] = jnp.where(lane < feat_in_tile, feat_ref[...], hot)
    return kernel


def onehot_append_pallas(feats_padded: jax.Array, tag_ids: jax.Array,
                         *, feat_dim: int, num_classes: int, b_tile: int) -> jax.Array:
    """feats_padded: (B_pad, OUT_PAD) f32 (features in [:feat_dim], zeros after)
       tag_ids:      (B_pad, SEQ_PAD) i8  (-1 = padding / unknown tag)
       returns       (B_pad, OUT_PAD) f32 = [features | multi-hot | zeros]"""
    b_pad, out_pad = feats_padded.shape
    _, seq_pad = tag_ids.shape
    assert b_pad % b_tile == 0 and out_pad % LANE == 0 and b_tile % SUBLANE == 0
    assert seq_pad & (seq_pad - 1) == 0, "seq_pad must be a power of two"
    assert num_classes <= 32, "bitmask reduction supports at most 32 classes"
    assert feat_dim + num_classes <= out_pad

    # Window: the lane-tile containing the multi-hot region. If it fits in a single
    # 128-lane tile, only that tile is read/written; input_output_aliases leaves all
    # other feature lane-tiles untouched in HBM. Otherwise fall back to full width.
    t0 = feat_dim // LANE
    t1 = (feat_dim + num_classes - 1) // LANE
    if t0 == t1:
        win_w = LANE
        win_blk = t0
        feat_in_tile = feat_dim - t0 * LANE
    else:
        win_w = out_pad
        win_blk = 0
        feat_in_tile = feat_dim

    return pl.pallas_call(
        _make_fused_kernel(feat_in_tile, num_classes),
        out_shape=jax.ShapeDtypeStruct((b_pad, out_pad), jnp.float32),
        grid=(b_pad // b_tile,),
        in_specs=[
            pl.BlockSpec((b_tile, win_w), lambda i, wb=win_blk: (i, wb)),   # feature window (aliased)
            pl.BlockSpec((b_tile, seq_pad), lambda i: (i, 0)),              # int8 tag ids (dense rows)
        ],
        out_specs=pl.BlockSpec((b_tile, win_w), lambda i, wb=win_blk: (i, wb)),
        # Write the multi-hot tail directly into the (donated, freshly-built) feature
        # buffer; lane-tiles outside the window are never DMAed and keep the features.
        input_output_aliases={0: 0},
        compiler_params=pltpu.CompilerParams(
            dimension_semantics=("parallel",)),
    )(feats_padded, tag_ids)


# ----------------------------------------------------------------------------
# OneHot module equivalent (batched)
# ----------------------------------------------------------------------------
class OneHot:
    def __init__(self, feat_type: str = "pos"):
        self.feat_type = feat_type
        # sklearn's OneHotEncoder.fit sorts categories alphabetically
        self.categories = sorted(TAG_VOCABS[feat_type])
        self.tag_to_idx = {t: i for i, t in enumerate(self.categories)}
        self.num_classes = len(self.categories)
        assert self.num_classes <= 32

    def forward_batch(self, samples):
        """Process a list of samples in a single pallas_call."""
        b = len(samples)
        feat_dim = int(np.asarray(samples[0][4]).shape[0])
        out_dim = feat_dim + self.num_classes
        out_pad = _round_up(out_dim, LANE)

        max_len = max(1, max(len(s[3][0]) for s in samples))
        seq_pad = _next_pow2(max(max_len, SUBLANE))   # bucketed -> few compiled shapes

        # Large streaming tiles (512-2048 range when the batch is big enough), but
        # keep the batch grid >= 2 steps when possible so v7x uses both TensorCores.
        # Multiple of 32 rows for friendly int8 row tiling.
        b_tile = min(1024, _round_up(max((b + 1) // 2, 1), 32))
        b_pad = _round_up(b, b_tile)

        feats = np.zeros((b_pad, out_pad), dtype=np.float32)
        tag_ids = np.full((b_pad, seq_pad), -1, dtype=np.int8)
        key = self.feat_type + "_"
        for r, (_sid, _content, _label, spacied, feature) in enumerate(samples):
            feats[r, :feat_dim] = np.asarray(feature, dtype=np.float32)
            for j, tok in enumerate(spacied[0]):
                tag_ids[r, j] = self.tag_to_idx.get(tok[key], -1)  # unknown -> -1 (ignored)

        out = onehot_append_pallas(jnp.asarray(feats), jnp.asarray(tag_ids),
                                   feat_dim=feat_dim, num_classes=self.num_classes,
                                   b_tile=b_tile)
        out_np = np.asarray(jax.block_until_ready(out))   # single bulk D2H copy

        results = []
        for r, (sid, content, label, spacied, _feature) in enumerate(samples):
            results.append((sid, content, label, spacied, out_np[r, :out_dim]))
        return results

    def forward(self, sample):
        # Single-sample path kept for API parity (prefer forward_batch for throughput).
        return self.forward_batch([sample])[0]


# ----------------------------------------------------------------------------
# Pure-numpy reference for correctness check
# ----------------------------------------------------------------------------
def reference_multihot(tag_strings, categories):
    n = len(categories)
    tag_to_idx = {t: i for i, t in enumerate(categories)}
    oh = np.zeros((len(tag_strings), n), dtype=np.float64)
    for r, t in enumerate(tag_strings):
        if t in tag_to_idx:
            oh[r, tag_to_idx[t]] = 1.0
    summed = np.sum(oh, axis=0)
    return np.where(summed >= 1, 1, 0).astype(np.float32)


if __name__ == "__main__":
    key = jax.random.PRNGKey(0)
    k1, k2 = jax.random.split(key)

    module = OneHot("pos")

    batch = 2
    seq = 8
    feat_dim = 32

    tag_idx = np.asarray(jax.random.randint(k1, (batch, seq), 0, module.num_classes))
    feats = jax.random.normal(k2, (batch, feat_dim), dtype=jnp.float32)
    feats_np = np.asarray(feats, dtype=np.float32)

    samples = []
    all_tag_strings = []
    for b in range(batch):
        tag_strings = [module.categories[int(i)] for i in tag_idx[b]]
        if b == 0:
            tag_strings[3] = "UNKNOWN_TAG"  # exercise handle_unknown='ignore'
        all_tag_strings.append(tag_strings)
        spacied = ([{"pos_": t} for t in tag_strings],)
        samples.append((f"sid-{b}", f"content-{b}", b % 2, spacied, feats_np[b]))

    # batched forward (single pallas_call for the whole batch)
    results = module.forward_batch(samples)

    for b in range(batch):
        ref_hot = reference_multihot(all_tag_strings[b], module.categories)
        ref_out = np.concatenate([feats_np[b], ref_hot])
        out_b = np.asarray(results[b][4])
        assert out_b.shape == (feat_dim + module.num_classes,)
        np.testing.assert_allclose(out_b, ref_out, rtol=0, atol=0)

    # single-sample API still matches
    single = module.forward(samples[1])
    np.testing.assert_allclose(
        np.asarray(single[4]), np.asarray(results[1][4]), rtol=0, atol=0)

    print("KERNEL_OK")
</pallas_src>

<mosaic_0001>
module attributes {stable_mosaic.version = 11 : i64} {
  func.func @kernel(%arg0: i32, %arg1: memref<32x128xf32, #tpu.memory_space<vmem>>, %arg2: memref<32x8xi8, #tpu.memory_space<vmem>>, %arg3: memref<32x128xf32, #tpu.memory_space<vmem>>) attributes {dimension_semantics = [#tpu.dimension_semantics<parallel>], iteration_bounds = array<i64: 1>, scalar_prefetch = 0 : i64, scratch_operands = 0 : i64, tpu.core_type = #tpu.core_type<tc>, window_params = [{transform_indices = @transform_0, window_bounds = array<i64: 32, 128>}, {transform_indices = @transform_1, window_bounds = array<i64: 32, 8>}, {transform_indices = @transform_2, window_bounds = array<i64: 32, 128>}]} {
    %c0 = arith.constant 0 : index
    %c0_0 = arith.constant 0 : index
    %0 = vector.load %arg2[%c0, %c0_0] : memref<32x8xi8, #tpu.memory_space<vmem>>, vector<32x8xi8>
    %1 = arith.extsi %0 : vector<32x8xi8> to vector<32x8xi32>
    %c0_i32 = arith.constant 0 : i32
    %2 = vector.broadcast %c0_i32 : i32 to vector<32x8xi32>
    %3 = arith.cmpi sge, %1, %2 : vector<32x8xi32>
    %c0_i32_1 = arith.constant 0 : i32
    %4 = vector.broadcast %c0_i32_1 : i32 to vector<32x8xi32>
    %5 = arith.maxsi %1, %4 : vector<32x8xi32>
    %c1_i32 = arith.constant 1 : i32
    %6 = vector.broadcast %c1_i32 : i32 to vector<32x8xi32>
    %7 = arith.shli %6, %5 : vector<32x8xi32>
    %c0_i32_2 = arith.constant 0 : i32
    %8 = vector.broadcast %c0_i32_2 : i32 to vector<32x8xi32>
    %9 = arith.select %3, %7, %8 : vector<32x8xi1>, vector<32x8xi32>
    %10 = vector.extract_strided_slice %9 {offsets = [0, 0], sizes = [32, 4], strides = [1, 1]} : vector<32x8xi32> to vector<32x4xi32>
    %11 = vector.extract_strided_slice %9 {offsets = [0, 4], sizes = [32, 4], strides = [1, 1]} : vector<32x8xi32> to vector<32x4xi32>
    %12 = arith.ori %10, %11 : vector<32x4xi32>
    %13 = vector.extract_strided_slice %12 {offsets = [0, 0], sizes = [32, 2], strides = [1, 1]} : vector<32x4xi32> to vector<32x2xi32>
    %14 = vector.extract_strided_slice %12 {offsets = [0, 2], sizes = [32, 2], strides = [1, 1]} : vector<32x4xi32> to vector<32x2xi32>
    %15 = arith.ori %13, %14 : vector<32x2xi32>
    %16 = vector.extract_strided_slice %15 {offsets = [0, 0], sizes = [32, 1], strides = [1, 1]} : vector<32x2xi32> to vector<32x1xi32>
    %17 = vector.extract_strided_slice %15 {offsets = [0, 1], sizes = [32, 1], strides = [1, 1]} : vector<32x2xi32> to vector<32x1xi32>
    %18 = arith.ori %16, %17 : vector<32x1xi32>
    %19 = tpu.iota {dimensions = array<i32: 1>} : vector<32x128xi32>
    %c32_i32 = arith.constant 32 : i32
    %20 = vector.broadcast %c32_i32 : i32 to vector<32x128xi32>
    %21 = arith.subi %19, %20 : vector<32x128xi32>
    %c0_i32_3 = arith.constant 0 : i32
    %c31_i32 = arith.constant 31 : i32
    %22 = vector.broadcast %c0_i32_3 : i32 to vector<32x128xi32>
    %23 = arith.maxsi %22, %21 : vector<32x128xi32>
    %24 = vector.broadcast %c31_i32 : i32 to vector<32x128xi32>
    %25 = arith.minsi %24, %23 : vector<32x128xi32>
    %26 = vector.broadcast %18 : vector<32x1xi32> to vector<32x128xi32>
    %27 = arith.shrsi %26, %25 : vector<32x128xi32>
    %c1_i32_4 = arith.constant 1 : i32
    %28 = vector.broadcast %c1_i32_4 : i32 to vector<32x128xi32>
    %29 = arith.andi %27, %28 : vector<32x128xi32>
    %c0_i32_5 = arith.constant 0 : i32
    %30 = vector.broadcast %c0_i32_5 : i32 to vector<32x128xi32>
    %31 = arith.cmpi sge, %21, %30 : vector<32x128xi32>
    %c20_i32 = arith.constant 20 : i32
    %32 = vector.broadcast %c20_i32 : i32 to vector<32x128xi32>
    %33 = arith.cmpi slt, %21, %32 : vector<32x128xi32>
    %34 = arith.andi %31, %33 : vector<32x128xi1>
    %c0_i32_6 = arith.constant 0 : i32
    %35 = vector.broadcast %c0_i32_6 : i32 to vector<32x128xi32>
    %36 = arith.select %34, %29, %35 : vector<32x128xi1>, vector<32x128xi32>
    %37 = arith.sitofp %36 : vector<32x128xi32> to vector<32x128xf32>
    %c32_i32_7 = arith.constant 32 : i32
    %38 = vector.broadcast %c32_i32_7 : i32 to vector<32x128xi32>
    %39 = arith.cmpi slt, %19, %38 : vector<32x128xi32>
    %c0_8 = arith.constant 0 : index
    %c0_9 = arith.constant 0 : index
    %40 = vector.load %arg1[%c0_8, %c0_9] : memref<32x128xf32, #tpu.memory_space<vmem>>, vector<32x128xf32>
    %41 = arith.select %39, %40, %37 : vector<32x128xi1>, vector<32x128xf32>
    %c0_10 = arith.constant 0 : index
    %c0_11 = arith.constant 0 : index
    %42 = vector.load %arg3[%c0_10, %c0_11] : memref<32x128xf32, #tpu.memory_space<vmem>>, vector<32x128xf32>
    tpu.vector_store %arg3[%c0_10, %c0_11], %41 {strides = array<i32>} : memref<32x128xf32, #tpu.memory_space<vmem>>, vector<32x128xf32>,
    return
  }
  func.func @transform_0(%arg0: i32) -> (i32, i32) {
    %c0_i32 = arith.constant 0 : i32
    %c0_i32_0 = arith.constant 0 : i32
    return %arg0, %c0_i32 : i32, i32
  }
  func.func @transform_1(%arg0: i32) -> (i32, i32) {
    %c0_i32 = arith.constant 0 : i32
    %c0_i32_0 = arith.constant 0 : i32
    return %arg0, %c0_i32 : i32, i32
  }
  func.func @transform_2(%arg0: i32) -> (i32, i32) {
    %c0_i32 = arith.constant 0 : i32
    %c0_i32_0 = arith.constant 0 : i32
    return %arg0, %c0_i32 : i32, i32
  }
}

</mosaic_0001>

<llo_original>
// kernel: tpu_custom_call.1
$region0: #{tpu_custom_call.1}
  #allocation0 [shape = 'u32[]', space=smem, size = 0x4, offset = 0x4, fixed_abs, tag = 'smem constant byte address 0x4 - core index']
  #allocation1 [shape = 'u32[72,128]{1,0:T(1,128)}', space=vmem, size = 0x9000, scoped, tag = 'internal scratch']
  %s0 = inlined_call_operand.hbm [shape: f32[32,128], index: 0, kind: input, shape index: {}, may-alias: {0,2}]
  %s1 = inlined_call_operand.vmem [shape: s8[32,8], index: 1, kind: input, shape index: {}]
  %s2 = inlined_call_operand.hbm [shape: f32[32,128], index: 2, kind: output, shape index: {}, may-alias: {0,2}]
  %s3 = sld [smem:[#allocation0]]
  $region22: #{tpu_custom_call.1} parent=0
    _
  %s5 = ssub.s32 1, %s3
  %s6 = scalar_select 0, %s5, %s3
  $region1: #{tpu_custom_call.1} parent=0
    #allocation2 [shape = 'u8[16384]{0}', space=vmem, size = 0x4000, scoped, tag = 'input window, operand 0, single buffered']
    #allocation3 [shape = 's32[1]{0}', space=sflag, size = 0x4, scoped, tag = 'scoped memory for tpu_custom_call.1']
    #allocation4 [shape = 's32[1]{0}', space=sflag, size = 0x4, scoped, tag = 'scoped memory for tpu_custom_call.1']
    #allocation5 [shape = 'u8[16384]{0}', space=vmem, size = 0x4000, scoped, tag = 'output window, operand 0, single buffered']
    %7 = vsyncpa [#allocation3], 0
    %8 = vsyncpa [#allocation4], 0
    // Predicated region
    $region2: #{tpu_custom_call.1} parent=1 // pred_check
      _
    $region3: #{tpu_custom_call.1} parent=1 // pred_check_branch
      %10 = sbr.rel (0) target = $region5
    $region4: #{tpu_custom_call.1} parent=1 // pred_region
      %12 = vsyncadd [#allocation3], 0
      %s13 = sshll.u32 %s0, 4
      %s14 = int_to_ptr.hbm [resolvable:$true] %s13
      %s15 = sshll.u32 [#allocation2], 4
      %s16 = int_to_ptr.vmem [resolvable:$true] %s15
      %21 = dma.hbm_to_vmem [thread:$0]  %s14, 512, %s16, [#allocation3], 128, 128, 8
    $region5: #{tpu_custom_call.1} parent=1 // pred_fallthru
      _
    // Predicated region
    $region6: #{tpu_custom_call.1} parent=1 // pred_check
      _
    $region7: #{tpu_custom_call.1} parent=1 // pred_check_branch
      %23 = sbr.rel (0) target = $region9
    $region8: #{tpu_custom_call.1} parent=1 // pred_region
      _
    $region9: #{tpu_custom_call.1} parent=1 // pred_fallthru
      _
    // Predicated region
    $region10: #{tpu_custom_call.1} parent=1 // pred_check
      _
    $region11: #{tpu_custom_call.1} parent=1 // pred_check_branch
      %25 = sbr.rel (0) target = $region13
    $region12: #{tpu_custom_call.1} parent=1 // pred_region
      %27 = dma.done [#allocation3], 512
    $region13: #{tpu_custom_call.1} parent=1 // pred_fallthru
      _
    %v28 = vld [vmem:[%s1] sm:$0x3]
    %v29 = vld [vmem:[%s1 + $0x2] sm:$0x3]
    %v30 = vld [vmem:[%s1 + $0x4] sm:$0x3]
    %v31 = vld [vmem:[%s1 + $0x6] sm:$0x3]
    %v32 = vunpack.c.0.s8 %v28
    %v33 = vunpack.c.0.s8 %v29
    %v34 = vunpack.c.0.s8 %v30
    %v35 = vunpack.c.0.s8 %v31
    %vm36 = vcmp.ge.s32.totalorder %v32, 0
    %vm37 = vcmp.ge.s32.totalorder %v33, 0
    %vm38 = vcmp.ge.s32.totalorder %v34, 0
    %vm39 = vcmp.ge.s32.totalorder %v35, 0
    %vm40 = vcmp.gt.s32.totalorder %v32, 0
    %v41 = vsel %vm40, %v32, 0
    %vm42 = vcmp.gt.s32.totalorder %v33, 0
    %v43 = vsel %vm42, %v33, 0
    %vm44 = vcmp.gt.s32.totalorder %v34, 0
    %v45 = vsel %vm44, %v34, 0
    %vm46 = vcmp.gt.s32.totalorder %v35, 0
    %v47 = vsel %vm46, %v35, 0
    %v48 = vshll.u32 1, %v41
    %v49 = vshll.u32 1, %v43
    %v50 = vshll.u32 1, %v45
    %v51 = vshll.u32 1, %v47
    %v52 = vsel %vm36, %v48, 0
    %v53 = vsel %vm37, %v49, 0
    %v54 = vsel %vm38, %v50, 0
    %v55 = vsel %vm39, %v51, 0
    %56 = vrot.lane.b32.xlu0 %v52, 124
    %v57 = vpop.permute.xlu0 %56
    %58 = vrot.lane.b32.xlu0 %v53, 124
    %v59 = vpop.permute.xlu0 %58
    %60 = vrot.lane.b32.xlu0 %v54, 124
    %v61 = vpop.permute.xlu0 %60
    %62 = vrot.lane.b32.xlu0 %v55, 124
    %v63 = vpop.permute.xlu0 %62
    %v64 = vor.u32 %v52, %v57
    %v65 = vor.u32 %v53, %v59
    %v66 = vor.u32 %v54, %v61
    %v67 = vor.u32 %v55, %v63
    %68 = vrot.lane.b32.xlu0 %v64, 126
    %v69 = vpop.permute.xlu0 %68
    %70 = vrot.lane.b32.xlu0 %v65, 126
    %v71 = vpop.permute.xlu0 %70
    %72 = vrot.lane.b32.xlu0 %v66, 126
    %v73 = vpop.permute.xlu0 %72
    %74 = vrot.lane.b32.xlu0 %v67, 126
    %v75 = vpop.permute.xlu0 %74
    %v76 = vor.u32 %v64, %v69
    %v77 = vor.u32 %v65, %v71
    %v78 = vor.u32 %v66, %v73
    %v79 = vor.u32 %v67, %v75
    %80 = vrot.lane.b32.xlu0 %v76, 127
    %v81 = vpop.permute.xlu0 %80
    %82 = vrot.lane.b32.xlu0 %v77, 127
    %v83 = vpop.permute.xlu0 %82
    %84 = vrot.lane.b32.xlu0 %v78, 127
    %v85 = vpop.permute.xlu0 %84
    %86 = vrot.lane.b32.xlu0 %v79, 127
    %v87 = vpop.permute.xlu0 %86
    %v88 = vor.u32 %v76, %v81
    %v89 = vor.u32 %v77, %v83
    %v90 = vor.u32 %v78, %v85
    %v91 = vor.u32 %v79, %v87
    %v92 = vlaneseq
    %v93 = vand.u32 %v92, 127
    %v94 = vsub.s32 %v93, 32
    %vm95 = vcmp.gt.s32.totalorder %v94, 0
    %v96 = vsel %vm95, %v94, 0
    %vm97 = vcmp.lt.s32.totalorder %v96, 31
    %v98 = vsel %vm97, %v96, 31
    %99 = vset.pattern.permute.xlu0 0
    %100 = vperm.xlu0 %99, %v88
    %v101 = vpop.permute.xlu0 %100
    %102 = vset.pattern.permute.xlu0 0
    %103 = vperm.xlu0 %102, %v89
    %v104 = vpop.permute.xlu0 %103
    %105 = vset.pattern.permute.xlu0 0
    %106 = vperm.xlu0 %105, %v90
    %v107 = vpop.permute.xlu0 %106
    %108 = vset.pattern.permute.xlu0 0
    %109 = vperm.xlu0 %108, %v91
    %v110 = vpop.permute.xlu0 %109
    %v111 = vshra.s32 %v101, %v98
    %v112 = vshra.s32 %v104, %v98
    %v113 = vshra.s32 %v107, %v98
    %v114 = vshra.s32 %v110, %v98
    %v115 = vand.u32 %v111, 1
    %v116 = vand.u32 %v112, 1
    %v117 = vand.u32 %v113, 1
    %v118 = vand.u32 %v114, 1
    %vm119 = vcmp.ge.s32.totalorder %v94, 0
    %vm120 = vcmp.lt.s32.totalorder %v94, 20
    %vm121 = vmand %vm119, %vm120
    %v122 = vsel %vm121, %v115, 0
    %v123 = vsel %vm121, %v116, 0
    %v124 = vsel %vm121, %v117, 0
    %v125 = vsel %vm121, %v118, 0
    %v126 = vcvt.s32.f32 %v122
    %v127 = vcvt.s32.f32 %v123
    %v128 = vcvt.s32.f32 %v124
    %v129 = vcvt.s32.f32 %v125
    %vm130 = vcmp.lt.s32.totalorder %v93, 32
    %v131 = vld [vmem:[#allocation2] sm:$0xff]
    %v132 = vld [vmem:[#allocation2 + $0x8] sm:$0xff]
    %v133 = vld [vmem:[#allocation2 + $0x10] sm:$0xff]
    %v134 = vld [vmem:[#allocation2 + $0x18] sm:$0xff]
    %v135 = vsel %vm130, %v131, %v126
    %v136 = vsel %vm130, %v132, %v127
    %v137 = vsel %vm130, %v133, %v128
    %v138 = vsel %vm130, %v134, %v129
    %139 = vst [vmem:[#allocation5] sm:$0xff] %v135
    %140 = vst [vmem:[#allocation5 + $0x8] sm:$0xff] %v136
    %141 = vst [vmem:[#allocation5 + $0x10] sm:$0xff] %v137
    %142 = vst [vmem:[#allocation5 + $0x18] sm:$0xff] %v138
    // Predicated region
    $region14: #{tpu_custom_call.1} parent=1 // pred_check
      _
    $region15: #{tpu_custom_call.1} parent=1 // pred_check_branch
      %144 = sbr.rel (0) target = $region17
    $region16: #{tpu_custom_call.1} parent=1 // pred_region
      %146 = vsyncadd [#allocation4], 0
      %s147 = sshll.u32 [#allocation5], 4
      %s148 = int_to_ptr.vmem [resolvable:$true] %s147
      %s149 = sshll.u32 %s2, 4
      %s150 = int_to_ptr.hbm [resolvable:$true] %s149
      %155 = dma.vmem_to_hbm [thread:$0]  %s148, 512, %s150, [#allocation4], 128, 128, 8
    $region17: #{tpu_custom_call.1} parent=1 // pred_fallthru
      _
    // Predicated region
    $region18: #{tpu_custom_call.1} parent=1 // pred_check
      _
    $region19: #{tpu_custom_call.1} parent=1 // pred_check_branch
      %157 = sbr.rel (0) target = $region21
    $region20: #{tpu_custom_call.1} parent=1 // pred_region
      %159 = dma.done [#allocation4], 512
    $region21: #{tpu_custom_call.1} parent=1 // pred_fallthru
      _
    %160 = vsyncpa [#allocation3], 1
    %161 = vsyncpa [#allocation4], 1

</llo_original>
